<compile_context>
chip_gen: v7x
topology: tpu7x:2x2x1
jax: 0.10.0
libtpu: 0.0.40
codegen_flags: <defaults>
</compile_context>

<pallas_src>
import functools

import jax
import jax.numpy as jnp
from jax.experimental import pallas as pl
from jax.experimental.pallas import tpu as pltpu


def _round_up(x, m):
    return (x + m - 1) // m * m


def _fused_predictor_kernel(x_ref, w_ref, b_cls_ref, b_bbox_ref,
                            cls_ref, bbox_ref, *, cls_pad):
    """One lane-dense MXU matmul (bf16 in-kernel cast, f32 acc) + f32 bias.

    Writes two lane-dense slabs: cls scores (padded to 128 lanes) and bbox
    deltas (padded to 128 lanes).  The split at `cls_pad` is 128-aligned so
    both slices of the f32 accumulator are free.
    """
    x_bf16 = x_ref[...].astype(jnp.bfloat16)          # cast on the VMEM tile
    acc = jnp.dot(x_bf16, w_ref[...], preferred_element_type=jnp.float32)
    cls_ref[...] = acc[:, :cls_pad] + b_cls_ref[...]
    bbox_ref[...] = acc[:, cls_pad:] + b_bbox_ref[...]


@functools.partial(jax.jit, static_argnames=("num_classes", "num_bbox_out"))
def fpn_predictor_forward(x, w_fused, b_cls, b_bbox, *, num_classes, num_bbox_out):
    # glue: flatten NCHW (N, D, 1, 1) -> (N, D), as in the torch forward
    if x.ndim == 4:
        assert x.shape[2] == 1 and x.shape[3] == 1
        x = x.reshape(x.shape[0], -1)

    n, d = x.shape
    cls_pad = b_cls.shape[1]                 # multiple of 128 (lane-dense)
    bbox_pad = b_bbox.shape[1]               # multiple of 128 (lane-dense)
    out_pad = cls_pad + bbox_pad
    assert w_fused.shape == (d, out_pad)

    # --- ROI tiling -----------------------------------------------------
    # Target large tiles (512 rows, ~85% of HBM roofline vs ~63% at 256) but
    # size them as ceil(n/2) so the parallel grid axis has >= 2 steps and
    # both v7x TensorCores get work.  16-row alignment matches bf16 sublane
    # packing.  If the tile would exceed n, collapse to a single full block
    # (block dim == array dim is always legal).
    tile_n = min(512, max(16, _round_up(pl.cdiv(n, 2), 16)))
    if tile_n >= n:
        tile_n = n
    grid = (pl.cdiv(n, tile_n),)             # ragged last block handled by Pallas

    kernel = functools.partial(_fused_predictor_kernel, cls_pad=cls_pad)

    cost = pl.CostEstimate(
        flops=2 * n * d * out_pad,
        bytes_accessed=(n * d * 4                # x (f32, read once)
                        + d * out_pad * 2        # fused weight (bf16, resident)
                        + (cls_pad + bbox_pad) * 4   # biases
                        + n * out_pad * 4),      # outputs (f32)
        transcendentals=0,
    )

    cls_out, bbox_out = pl.pallas_call(
        kernel,
        out_shape=(jax.ShapeDtypeStruct((n, cls_pad), jnp.float32),
                   jax.ShapeDtypeStruct((n, bbox_pad), jnp.float32)),
        grid=grid,
        in_specs=[
            pl.BlockSpec((tile_n, d), lambda i: (i, 0)),        # x tile (pipelined)
            pl.BlockSpec((d, out_pad), lambda i: (0, 0)),       # fused weight (resident)
            pl.BlockSpec((1, cls_pad), lambda i: (0, 0)),       # cls bias (resident)
            pl.BlockSpec((1, bbox_pad), lambda i: (0, 0)),      # bbox bias (resident)
        ],
        out_specs=(
            pl.BlockSpec((tile_n, cls_pad), lambda i: (i, 0)),
            pl.BlockSpec((tile_n, bbox_pad), lambda i: (i, 0)),
        ),
        compiler_params=pltpu.CompilerParams(
            dimension_semantics=("parallel",),
            vmem_limit_bytes=32 * 1024 * 1024,
        ),
        cost_estimate=cost,
    )(x, w_fused, b_cls, b_bbox)

    # Un-pad in plain JAX: both slices start at column 0 (lane-aligned).
    scores = cls_out[:, :num_classes]
    bbox_deltas = bbox_out[:, :num_bbox_out]
    return scores, bbox_deltas


def build_params(key, representation_size, num_classes, num_old_classes,
                 cls_offset_flag=True, bbox_offset_flag=True,
                 cls_agnostic_bbox_reg=False):
    """Synthetic parameters matching FPNPredictor.__init__, plus the fused,
    offset-folded, lane-padded, bf16 weight used by the Pallas kernel.

    Returns (kernel_params, raw_params):
      kernel_params = (w_fused_bf16, b_cls_f32, b_bbox_f32, num_bbox_out)
      raw_params    = dict of the original (torch-equivalent) f32 parameters,
                      used by the pure-JAX reference.
    """
    num_bbox_reg_classes = 2 if cls_agnostic_bbox_reg else num_classes
    num_bbox_out = num_bbox_reg_classes * 4

    k_cls, k_bbox = jax.random.split(key)
    # torch: nn.init.normal_(cls_score.weight, std=0.01); bias = 0
    w_cls = (0.01 * jax.random.normal(
        k_cls, (representation_size, num_classes))).astype(jnp.float32)
    b_cls = jnp.zeros((num_classes,), jnp.float32)
    # torch: nn.init.normal_(bbox_pred.weight, std=0.001); bias = 0
    w_bbox = (0.001 * jax.random.normal(
        k_bbox, (representation_size, num_bbox_out))).astype(jnp.float32)
    b_bbox = jnp.zeros((num_bbox_out,), jnp.float32)

    # offset parameters (torch init: ones / zeros)
    cls_offset_w = jnp.ones((1,), jnp.float32)
    cls_offset_b = jnp.zeros((1,), jnp.float32)
    bbox_offset_w = jnp.ones((1, 4), jnp.float32)
    bbox_offset_b = jnp.zeros((1, 4), jnp.float32)

    raw = dict(w_cls=w_cls, b_cls=b_cls, w_bbox=w_bbox, b_bbox=b_bbox,
               cls_offset_w=cls_offset_w, cls_offset_b=cls_offset_b,
               bbox_offset_w=bbox_offset_w, bbox_offset_b=bbox_offset_b)

    # ---- fold offsets into per-column scale/shift vectors ----
    cls_cols = jnp.arange(num_classes)
    if cls_offset_flag:
        cls_scale = jnp.where(cls_cols >= num_old_classes, cls_offset_w[0], 1.0)
        cls_shift = jnp.where(cls_cols >= num_old_classes, cls_offset_b[0], 0.0)
    else:
        cls_scale = jnp.ones((num_classes,), jnp.float32)
        cls_shift = jnp.zeros((num_classes,), jnp.float32)

    bbox_cols = jnp.arange(num_bbox_out)
    if bbox_offset_flag:
        # torch broadcasts (N, 4*num_new) * (1, 4): only valid for exactly one
        # new class — assert so a different config can't silently go wrong.
        assert num_classes - num_old_classes == 1, (
            "bbox offset fold requires exactly one new class "
            "(num_classes - num_old_classes == 1)")
        per_col_w = bbox_offset_w[0, bbox_cols % 4]
        per_col_b = bbox_offset_b[0, bbox_cols % 4]
        bbox_scale = jnp.where(bbox_cols >= num_old_classes * 4, per_col_w, 1.0)
        bbox_shift = jnp.where(bbox_cols >= num_old_classes * 4, per_col_b, 0.0)
    else:
        bbox_scale = jnp.ones((num_bbox_out,), jnp.float32)
        bbox_shift = jnp.zeros((num_bbox_out,), jnp.float32)

    # ---- fold scale/shift into weights/bias (mathematically identical) ----
    w_cls_eff = w_cls * cls_scale[None, :]
    b_cls_eff = b_cls * cls_scale + cls_shift
    w_bbox_eff = w_bbox * bbox_scale[None, :]
    b_bbox_eff = b_bbox * bbox_scale + bbox_shift

    # ---- fuse along output dim with 128-lane-ALIGNED sub-slabs ----
    # cls columns occupy [0, cls_pad); bbox columns occupy [cls_pad, out_pad).
    cls_pad = _round_up(num_classes, 128)
    bbox_pad = _round_up(num_bbox_out, 128)
    out_pad = cls_pad + bbox_pad

    w_fused = jnp.zeros((representation_size, out_pad), jnp.float32)
    w_fused = w_fused.at[:, :num_classes].set(w_cls_eff)
    w_fused = w_fused.at[:, cls_pad:cls_pad + num_bbox_out].set(w_bbox_eff)

    b_cls_pad = jnp.zeros((1, cls_pad), jnp.float32)
    b_cls_pad = b_cls_pad.at[0, :num_classes].set(b_cls_eff)
    b_bbox_pad = jnp.zeros((1, bbox_pad), jnp.float32)
    b_bbox_pad = b_bbox_pad.at[0, :num_bbox_out].set(b_bbox_eff)

    w_fused = w_fused.astype(jnp.bfloat16)   # MXU-native; biases stay f32
    return (w_fused, b_cls_pad, b_bbox_pad, num_bbox_out), raw


def reference_forward(x, raw, num_old_classes,
                      cls_offset_flag=True, bbox_offset_flag=True):
    """Pure-JAX f32 reference reproducing the torch forward exactly."""
    if x.ndim == 4:
        x = x.reshape(x.shape[0], -1)
    scores = x @ raw["w_cls"] + raw["b_cls"]
    if cls_offset_flag:
        new = scores[:, num_old_classes:] * raw["cls_offset_w"] + raw["cls_offset_b"]
        scores = scores.at[:, num_old_classes:].set(new)
    bbox = x @ raw["w_bbox"] + raw["b_bbox"]
    if bbox_offset_flag:
        new = (bbox[:, num_old_classes * 4:] * raw["bbox_offset_w"]
               + raw["bbox_offset_b"])
        bbox = bbox.at[:, num_old_classes * 4:].set(new)
    return scores, bbox


if __name__ == "__main__":
    # Small synthetic config:
    #   representation_size (in_channels) = 32
    #   NUM_CLASSES = 8, NAME_OLD_CLASSES has 6 entries -> num_old_classes = 7
    #   NAME_NEW_CLASSES has 1 entry, CLS_AGNOSTIC_BBOX_REG = False
    #   CLS_OFFSET = True, BBS_OFFSET = True
    representation_size = 32
    num_classes = 8
    num_old_classes = 7
    num_rois = 8

    key = jax.random.PRNGKey(0)
    k_x, k_p = jax.random.split(key)

    # ROI features in NCHW with spatial 1x1, as produced by the FPN box head.
    x = jax.random.normal(k_x, (num_rois, representation_size, 1, 1),
                          dtype=jnp.float32)

    (w_fused, b_cls_pad, b_bbox_pad, num_bbox_out), raw = build_params(
        k_p, representation_size, num_classes, num_old_classes,
        cls_offset_flag=True, bbox_offset_flag=True,
        cls_agnostic_bbox_reg=False)

    scores, bbox_deltas = fpn_predictor_forward(
        x, w_fused, b_cls_pad, b_bbox_pad,
        num_classes=num_classes, num_bbox_out=num_bbox_out)
    scores = jax.block_until_ready(scores)
    bbox_deltas = jax.block_until_ready(bbox_deltas)

    ref_scores, ref_bbox = reference_forward(x, raw, num_old_classes)

    assert scores.shape == (num_rois, num_classes)
    assert bbox_deltas.shape == (num_rois, num_bbox_out)
    # Tolerances relaxed vs. a pure-f32 pipeline because x / weights go
    # through bf16 before the MXU (accumulation and epilogue are f32).
    assert jnp.allclose(scores, ref_scores, atol=5e-3, rtol=2e-2)
    assert jnp.allclose(bbox_deltas, ref_bbox, atol=5e-3, rtol=2e-2)

    print("KERNEL_OK")
</pallas_src>

<mosaic_0001>
module attributes {stable_mosaic.version = 11 : i64} {
  func.func @_fused_predictor_kernel(%arg0: i32, %arg1: memref<8x32xf32, #tpu.memory_space<vmem>>, %arg2: memref<32x256xbf16, #tpu.memory_space<vmem>>, %arg3: memref<1x128xf32, #tpu.memory_space<vmem>>, %arg4: memref<1x128xf32, #tpu.memory_space<vmem>>, %arg5: memref<8x128xf32, #tpu.memory_space<vmem>>, %arg6: memref<8x128xf32, #tpu.memory_space<vmem>>) attributes {dimension_semantics = [#tpu.dimension_semantics<parallel>], iteration_bounds = array<i64: 1>, scalar_prefetch = 0 : i64, scratch_operands = 0 : i64, tpu.core_type = #tpu.core_type<tc>, window_params = [{transform_indices = @transform_0, window_bounds = array<i64: 8, 32>}, {pipeline_mode = #tpu.pipeline_mode<synchronous>, transform_indices = @transform_1, window_bounds = array<i64: 32, 256>}, {pipeline_mode = #tpu.pipeline_mode<synchronous>, transform_indices = @transform_2, window_bounds = array<i64: 1, 128>}, {pipeline_mode = #tpu.pipeline_mode<synchronous>, transform_indices = @transform_3, window_bounds = array<i64: 1, 128>}, {transform_indices = @transform_4, window_bounds = array<i64: 8, 128>}, {transform_indices = @transform_5, window_bounds = array<i64: 8, 128>}]} {
    %c0 = arith.constant 0 : index
    %c0_0 = arith.constant 0 : index
    %0 = vector.load %arg1[%c0, %c0_0] : memref<8x32xf32, #tpu.memory_space<vmem>>, vector<8x32xf32>
    %1 = arith.truncf %0 : vector<8x32xf32> to vector<8x32xbf16>
    %c0_1 = arith.constant 0 : index
    %c0_2 = arith.constant 0 : index
    %2 = vector.load %arg2[%c0_1, %c0_2] : memref<32x256xbf16, #tpu.memory_space<vmem>>, vector<32x256xbf16>
    %cst = arith.constant dense<0.000000e+00> : vector<8x256xf32>
    %3 = tpu.matmul %1, %2, %cst {dimension_numbers = #tpu.dot_dimension_numbers<[1], [0], [0], [1], [0, 0, 1, 1], [], []>} : vector<8x32xbf16>, vector<32x256xbf16>, vector<8x256xf32> -> vector<8x256xf32>
    %4 = vector.extract_strided_slice %3 {offsets = [0, 0], sizes = [8, 128], strides = [1, 1]} : vector<8x256xf32> to vector<8x128xf32>
    %c0_3 = arith.constant 0 : index
    %c0_4 = arith.constant 0 : index
    %5 = vector.load %arg3[%c0_3, %c0_4] : memref<1x128xf32, #tpu.memory_space<vmem>>, vector<1x128xf32>
    %6 = vector.broadcast %5 : vector<1x128xf32> to vector<8x128xf32>
    %7 = arith.addf %4, %6 : vector<8x128xf32>
    %c0_5 = arith.constant 0 : index
    %c0_6 = arith.constant 0 : index
    %8 = vector.load %arg5[%c0_5, %c0_6] : memref<8x128xf32, #tpu.memory_space<vmem>>, vector<8x128xf32>
    tpu.vector_store %arg5[%c0_5, %c0_6], %7 {strides = array<i32>} : memref<8x128xf32, #tpu.memory_space<vmem>>, vector<8x128xf32>,
    %9 = vector.extract_strided_slice %3 {offsets = [0, 128], sizes = [8, 128], strides = [1, 1]} : vector<8x256xf32> to vector<8x128xf32>
    %c0_7 = arith.constant 0 : index
    %c0_8 = arith.constant 0 : index
    %10 = vector.load %arg4[%c0_7, %c0_8] : memref<1x128xf32, #tpu.memory_space<vmem>>, vector<1x128xf32>
    %11 = vector.broadcast %10 : vector<1x128xf32> to vector<8x128xf32>
    %12 = arith.addf %9, %11 : vector<8x128xf32>
    %c0_9 = arith.constant 0 : index
    %c0_10 = arith.constant 0 : index
    %13 = vector.load %arg6[%c0_9, %c0_10] : memref<8x128xf32, #tpu.memory_space<vmem>>, vector<8x128xf32>
    tpu.vector_store %arg6[%c0_9, %c0_10], %12 {strides = array<i32>} : memref<8x128xf32, #tpu.memory_space<vmem>>, vector<8x128xf32>,
    return
  }
  func.func @transform_0(%arg0: i32) -> (i32, i32) {
    %c0_i32 = arith.constant 0 : i32
    %c0_i32_0 = arith.constant 0 : i32
    return %arg0, %c0_i32 : i32, i32
  }
  func.func @transform_1(%arg0: i32) -> (i32, i32) {
    %c0_i32 = arith.constant 0 : i32
    %c0_i32_0 = arith.constant 0 : i32
    %c0_i32_1 = arith.constant 0 : i32
    return %c0_i32, %c0_i32_0 : i32, i32
  }
  func.func @transform_2(%arg0: i32) -> (i32, i32) {
    %c0_i32 = arith.constant 0 : i32
    %c0_i32_0 = arith.constant 0 : i32
    %c0_i32_1 = arith.constant 0 : i32
    return %c0_i32, %c0_i32_0 : i32, i32
  }
  func.func @transform_3(%arg0: i32) -> (i32, i32) {
    %c0_i32 = arith.constant 0 : i32
    %c0_i32_0 = arith.constant 0 : i32
    %c0_i32_1 = arith.constant 0 : i32
    return %c0_i32, %c0_i32_0 : i32, i32
  }
  func.func @transform_4(%arg0: i32) -> (i32, i32) {
    %c0_i32 = arith.constant 0 : i32
    %c0_i32_0 = arith.constant 0 : i32
    return %arg0, %c0_i32 : i32, i32
  }
  func.func @transform_5(%arg0: i32) -> (i32, i32) {
    %c0_i32 = arith.constant 0 : i32
    %c0_i32_0 = arith.constant 0 : i32
    return %arg0, %c0_i32 : i32, i32
  }
}

</mosaic_0001>

<llo_original>
// kernel: fpn_predictor_forward.1
$region0: #{fpn_predictor_forward.1}
  #allocation0 [shape = 'u32[]', space=smem, size = 0x4, offset = 0x4, fixed_abs, tag = 'smem constant byte address 0x4 - core index']
  #allocation1 [shape = 'u32[144,128]{1,0:T(1,128)}', space=vmem, size = 0x12000, scoped, tag = 'internal scratch']
  %s0 = inlined_call_operand.hbm [shape: f32[8,32], index: 0, kind: input, shape index: {}]
  %s1 = inlined_call_operand.hbm [shape: bf16[32,256], index: 1, kind: input, shape index: {}]
  %s2 = inlined_call_operand.vmem [shape: f32[1,128], index: 2, kind: input, shape index: {}]
  %s3 = inlined_call_operand.vmem [shape: f32[1,128], index: 3, kind: input, shape index: {}]
  %s4 = inlined_call_operand.hbm [shape: f32[8,128], index: 4, kind: output, shape index: {0}]
  %s5 = inlined_call_operand.hbm [shape: f32[8,128], index: 5, kind: output, shape index: {1}]
  %6 = xla_tuple %s4, %s5
  %s7 = sld [smem:[#allocation0]]
  $region42: #{fpn_predictor_forward.1} parent=0
    _
  %s9 = ssub.s32 1, %s7
  %s10 = scalar_select 0, %s9, %s7
  $region1: #{fpn_predictor_forward.1} parent=0
    #allocation2 [shape = 'u8[4096]{0}', space=vmem, size = 0x1000, scoped, tag = 'input window, operand 0, single buffered']
    #allocation3 [shape = 's32[1]{0}', space=sflag, size = 0x4, scoped, tag = 'scoped memory for fpn_predictor_forward.1']
    #allocation4 [shape = 's32[1]{0}', space=sflag, size = 0x4, scoped, tag = 'scoped memory for fpn_predictor_forward.1']
    #allocation5 [shape = 'u8[16384]{0}', space=vmem, size = 0x4000, scoped, tag = 'input window, operand 1, single buffered']
    #allocation6 [shape = 's32[1]{0}', space=sflag, size = 0x4, scoped, tag = 'scoped memory for fpn_predictor_forward.1']
    #allocation7 [shape = 'u8[4096]{0}', space=vmem, size = 0x1000, scoped, tag = 'output window, operand 0, single buffered']
    #allocation8 [shape = 'u8[4096]{0}', space=vmem, size = 0x1000, scoped, tag = 'output window, operand 1, single buffered']
    #allocation9 [shape = 's32[1]{0}', space=sflag, size = 0x4, scoped, tag = 'scoped memory for fpn_predictor_forward.1']
    %11 = vsyncpa [#allocation3], 0
    %12 = vsyncpa [#allocation6], 0
    %13 = vsyncpa [#allocation4], 0
    %14 = vsyncpa [#allocation9], 0
    // Predicated region
    $region2: #{fpn_predictor_forward.1} parent=1 // pred_check
      _
    $region3: #{fpn_predictor_forward.1} parent=1 // pred_check_branch
      %16 = sbr.rel (0) target = $region5
    $region4: #{fpn_predictor_forward.1} parent=1 // pred_region
      %s18 = ssub.s32 128, 128
      %19 = vsyncadd [#allocation3], %s18
      %s21 = sshll.u32 [#allocation2], 4
      %s22 = int_to_ptr.vmem [resolvable:$true] %s21
      %24 = dma.hbm_to_vmem [thread:$0]  %s0, 128, %s22, [#allocation3]
    $region5: #{fpn_predictor_forward.1} parent=1 // pred_fallthru
      _
    // Predicated region
    $region6: #{fpn_predictor_forward.1} parent=1 // pred_check
      _
    $region7: #{fpn_predictor_forward.1} parent=1 // pred_check_branch
      %26 = sbr.rel (0) target = $region9
    $region8: #{fpn_predictor_forward.1} parent=1 // pred_region
      %s28 = ssub.s32 512, 512
      %29 = vsyncadd [#allocation6], %s28
      %s30 = sshll.u32 [#allocation5], 4
      %s31 = int_to_ptr.vmem [resolvable:$true] %s30
      %36 = dma.hbm_to_vmem [thread:$0]  %s1, 512, %s31, [#allocation6], 128, 128, 8
    $region9: #{fpn_predictor_forward.1} parent=1 // pred_fallthru
      _
    // Predicated region
    $region10: #{fpn_predictor_forward.1} parent=1 // pred_check
      _
    $region11: #{fpn_predictor_forward.1} parent=1 // pred_check_branch
      %38 = sbr.rel (0) target = $region13
    $region12: #{fpn_predictor_forward.1} parent=1 // pred_region
      _
    $region13: #{fpn_predictor_forward.1} parent=1 // pred_fallthru
      _
    // Predicated region
    $region14: #{fpn_predictor_forward.1} parent=1 // pred_check
      _
    $region15: #{fpn_predictor_forward.1} parent=1 // pred_check_branch
      %40 = sbr.rel (0) target = $region17
    $region16: #{fpn_predictor_forward.1} parent=1 // pred_region
      _
    $region17: #{fpn_predictor_forward.1} parent=1 // pred_fallthru
      _
    // Predicated region
    $region18: #{fpn_predictor_forward.1} parent=1 // pred_check
      _
    $region19: #{fpn_predictor_forward.1} parent=1 // pred_check_branch
      %42 = sbr.rel (0) target = $region21
    $region20: #{fpn_predictor_forward.1} parent=1 // pred_region
      %43 = dma.done [#allocation3], 128
    $region21: #{fpn_predictor_forward.1} parent=1 // pred_fallthru
      _
    // Predicated region
    $region22: #{fpn_predictor_forward.1} parent=1 // pred_check
      _
    $region23: #{fpn_predictor_forward.1} parent=1 // pred_check_branch
      %45 = sbr.rel (0) target = $region25
    $region24: #{fpn_predictor_forward.1} parent=1 // pred_region
      %46 = dma.done [#allocation6], 512
    $region25: #{fpn_predictor_forward.1} parent=1 // pred_fallthru
      _
    %v48 = vld [vmem:[#allocation2] sm:$0xff]
    %v49 = vpack.c.bf16 %v48, %v48
    %v50 = vld [vmem:[#allocation5] sm:$0xff]
    %v51 = vld [vmem:[#allocation5 + $0x8] sm:$0xff]
    %v52 = vld [vmem:[#allocation5 + $0x10] sm:$0xff]
    %v53 = vld [vmem:[#allocation5 + $0x18] sm:$0xff]
    %v58 = vunpack.c.l.b16 %v50
    %v59 = vunpack.c.h.b16 %v50
    %v60 = vunpack.c.l.b16 %v51
    %v61 = vunpack.c.h.b16 %v51
    %v62 = vunpack.c.l.b16 %v52
    %v63 = vunpack.c.h.b16 %v52
    %v64 = vunpack.c.l.b16 %v53
    %v65 = vunpack.c.h.b16 %v53
    %v66 = vpack.c.b16 %v60, %v58
    %v67 = vpack.c.b16 %v61, %v59
    %v68 = vpack.c.b16 %v64, %v62
    %v69 = vpack.c.b16 %v65, %v63
    %vm74 = vcmask 261120
    %v76 = vsel %vm74, %v49, 0
    %78 = vmatprep.subr.bf16.mxu0 %v67
    %79 = vmatpush1.bf16.msra.mxu0 %v66
    %80 = vmatprep.subr.bf16.mxu0 %v69
    %81 = vmatpush1.bf16.msra.mxu0 %v68
    %82 = vmatprep.subr.bf16.mxu0 0
    %83 = vmatpush1.bf16.msra.mxu0 0
    %84 = vmatprep.subr.bf16.mxu0 0
    %85 = vmatpush1.bf16.msra.mxu0 0
    %86 = vmatprep.subr.bf16.mxu0 0
    %87 = vmatpush1.bf16.msra.mxu0 0
    %88 = vmatprep.subr.bf16.mxu0 0
    %89 = vmatpush1.bf16.msra.mxu0 0
    %90 = vmatprep.subr.bf16.mxu0 0
    %91 = vmatpush1.bf16.msra.mxu0 0
    %92 = vmatprep.subr.bf16.mxu0 0
    %93 = vmatpush1.bf16.msra.mxu0 0
    %94 = vmatprep.subr.bf16.mxu0 0
    %95 = vmatpush1.bf16.msra.mxu0 0
    %96 = vmatprep.subr.bf16.mxu0 0
    %97 = vmatpush1.bf16.msra.mxu0 0
    %98 = vmatprep.subr.bf16.mxu0 0
    %99 = vmatpush1.bf16.msra.mxu0 0
    %100 = vmatprep.subr.bf16.mxu0 0
    %101 = vmatpush1.bf16.msra.mxu0 0
    %102 = vmatprep.subr.bf16.mxu0 0
    %103 = vmatpush1.bf16.msra.mxu0 0
    %104 = vmatprep.subr.bf16.mxu0 0
    %105 = vmatpush1.bf16.msra.mxu0 0
    %106 = vmatprep.subr.bf16.mxu0 0
    %107 = vmatpush1.bf16.msra.mxu0 0
    %108 = vmatprep.subr.bf16.mxu0 0
    %109 = vmatpush1.bf16.msra.mxu0 0
    %110 = vmatprep.mubr.bf16.mxu0 0
    %111 = vmatmul.mubr.bf16.gmra.mrb[0].mxu0 %v76
    %v112 = vpop.f32.mrb[0].mxu0
    %v113 = vadd.f32 0.0, %v112
    %v114 = vpop.f32.mrb[0].mxu0
    %v115 = vadd.f32 0.0, %v114
    %v116 = vpop.f32.mrb[0].mxu0
    %v117 = vpop.f32.mrb[0].mxu0
    %118 = vdwg.mxu0
    %v119 = vld [vmem:[%s2] sm:$0x1]
    %v121 = vlaneseq
    %v122 = vshrl.u32 %v121, 7
    %v123 = vsub.s32 0, %v122
    %v124 = vrot.slane %v119, %v123
    %v126 = vadd.f32 %v113, %v124
    %127 = vst [vmem:[#allocation7] sm:$0xff] %v126
    %v128 = vld [vmem:[%s3] sm:$0x1]
    %v130 = vlaneseq
    %v131 = vshrl.u32 %v130, 7
    %v132 = vsub.s32 0, %v131
    %v133 = vrot.slane %v128, %v132
    %v135 = vadd.f32 %v115, %v133
    %136 = vst [vmem:[#allocation8] sm:$0xff] %v135
    // Predicated region
    $region26: #{fpn_predictor_forward.1} parent=1 // pred_check
      _
    $region27: #{fpn_predictor_forward.1} parent=1 // pred_check_branch
      %138 = sbr.rel (0) target = $region29
    $region28: #{fpn_predictor_forward.1} parent=1 // pred_region
      %s140 = ssub.s32 128, 128
      %141 = vsyncadd [#allocation4], %s140
      %s143 = sshll.u32 [#allocation7], 4
      %s144 = int_to_ptr.vmem [resolvable:$true] %s143
      %146 = dma.vmem_to_hbm [thread:$0]  %s144, 128, %s4, [#allocation4]
    $region29: #{fpn_predictor_forward.1} parent=1 // pred_fallthru
      _
    // Predicated region
    $region30: #{fpn_predictor_forward.1} parent=1 // pred_check
      _
    $region31: #{fpn_predictor_forward.1} parent=1 // pred_check_branch
      %148 = sbr.rel (0) target = $region33
    $region32: #{fpn_predictor_forward.1} parent=1 // pred_region
      %s150 = ssub.s32 128, 128
      %151 = vsyncadd [#allocation9], %s150
      %s153 = sshll.u32 [#allocation8], 4
      %s154 = int_to_ptr.vmem [resolvable:$true] %s153
      %156 = dma.vmem_to_hbm [thread:$0]  %s154, 128, %s5, [#allocation9]
    $region33: #{fpn_predictor_forward.1} parent=1 // pred_fallthru
      _
    // Predicated region
    $region34: #{fpn_predictor_forward.1} parent=1 // pred_check
      _
    $region35: #{fpn_predictor_forward.1} parent=1 // pred_check_branch
      %158 = sbr.rel (0) target = $region37
    $region36: #{fpn_predictor_forward.1} parent=1 // pred_region
      %159 = dma.done [#allocation4], 128
    $region37: #{fpn_predictor_forward.1} parent=1 // pred_fallthru
      _
    // Predicated region
    $region38: #{fpn_predictor_forward.1} parent=1 // pred_check
      _
    $region39: #{fpn_predictor_forward.1} parent=1 // pred_check_branch
      %161 = sbr.rel (0) target = $region41
    $region40: #{fpn_predictor_forward.1} parent=1 // pred_region
      %162 = dma.done [#allocation9], 128
    $region41: #{fpn_predictor_forward.1} parent=1 // pred_fallthru
      _
    %163 = vsyncpa [#allocation3], 1
    %164 = vsyncpa [#allocation6], 1
    %165 = vsyncpa [#allocation4], 1
    %166 = vsyncpa [#allocation9], 1

</llo_original>
